<compile_context>
chip_gen: v7x
topology: tpu7x:2x2x1
jax: 0.10.0
libtpu: 0.0.40
codegen_flags: <defaults>
</compile_context>

<pallas_src>
import functools

import jax
import jax.numpy as jnp
from jax.experimental import pallas as pl
from jax.experimental.pallas import tpu as pltpu


def _round_up(x, m):
    return (x + m - 1) // m * m


def fc_kernel(x_ref, w1_ref, b1_ref, w2_ref, b2_ref, w3_ref, b3_ref, o_ref):
    """One batch tile: (Linear + ReLU) x 3; intermediates never leave VMEM/regs."""
    cdt = w1_ref.dtype  # MXU operand dtype (bf16)
    # Layer 1: Linear + ReLU (fp32 accumulate, bf16 re-cast for next MXU op).
    h = jnp.dot(x_ref[...], w1_ref[...], preferred_element_type=jnp.float32)
    h = jnp.maximum(h + b1_ref[...], 0.0).astype(cdt)
    # Layer 2: Linear + ReLU (lane-dense: hidden dims padded to 128 multiples).
    h = jnp.dot(h, w2_ref[...], preferred_element_type=jnp.float32)
    h = jnp.maximum(h + b2_ref[...], 0.0).astype(cdt)
    # Output layer: Linear + ReLU, single per-tile store.
    y = jnp.dot(h, w3_ref[...], preferred_element_type=jnp.float32)
    # TODO(synk): f_out < 128 means masked (vst.msk) stores; if writeback ever
    # dominates at huge batch, pad f_out to 128 and slice outside (measure —
    # it multiplies write bytes 8x), or request a bf16 out_dtype.
    o_ref[...] = jnp.maximum(y + b3_ref[...], 0.0).astype(o_ref.dtype)


def _fused_mlp(x, w1, b1, w2, b2, w3, b3, out_dtype):
    B, f_in = x.shape
    h1 = w1.shape[1]
    h2 = w2.shape[1]
    f_out = w3.shape[1]

    # Batch tile: big tiles amortize per-step overhead (~0.35 us / ~600 cyc) and
    # keep x/out streaming near the HBM roofline; per-step VMEM at tb=2048 with
    # 128-wide hidden dims is only a few MiB.  Ensure >=2 grid steps when the
    # batch is large enough so v7x's two TensorCores both get work (no-op on
    # the single-TC v5e/v6e).
    sub = 16 if x.dtype == jnp.bfloat16 else 8
    TB_MAX = 2048
    MIN_STEPS = 2
    tb = min(TB_MAX, _round_up(pl.cdiv(B, MIN_STEPS), sub))
    if tb >= B:
        tb = B  # single block covering the whole (possibly unaligned) batch
    grid = (pl.cdiv(B, tb),)
    # No jnp.pad / out[:B]: the ragged last block is masked by Pallas; garbage
    # rows only feed row-independent ops and their outputs are discarded.

    def nbytes(a):
        return a.size * a.dtype.itemsize

    # VMEM budget: resident params + double-buffered x/out tiles + fp32
    # intermediates, 2x margin, capped at 48 MiB (fits v7x's 64 MiB/TC).
    weight_bytes = sum(nbytes(a) for a in (w1, b1, w2, b2, w3, b3))
    io_bytes = 2 * tb * (f_in * x.dtype.itemsize
                         + f_out * jnp.dtype(out_dtype).itemsize)
    act_bytes = tb * (h1 + h2) * 6  # fp32 accum + bf16 re-cast copies
    vmem_limit = int(min(48 << 20,
                         max(16 << 20, 2 * (weight_bytes + io_bytes + act_bytes))))

    # Weights/biases use a constant block index -> resident in VMEM, never
    # re-DMA'd across batch steps.
    # TODO(synk): on v7x with multi-MiB hidden sizes, add
    # pipeline_mode=pl.Buffered(1) to these resident specs to drop the dead
    # second buffer (negligible at today's ~50 KiB of params).
    resident = lambda shape: pl.BlockSpec(shape, lambda i: tuple(0 for _ in shape))

    flops = 2 * B * (f_in * h1 + h1 * h2 + h2 * f_out) + 3 * B * (h1 + h2 + f_out)
    bytes_accessed = (nbytes(x) + B * f_out * jnp.dtype(out_dtype).itemsize
                      + weight_bytes)

    return pl.pallas_call(
        fc_kernel,
        out_shape=jax.ShapeDtypeStruct((B, f_out), out_dtype),
        grid=grid,
        in_specs=[
            pl.BlockSpec((tb, f_in), lambda i: (i, 0)),   # x streamed over batch
            resident((f_in, h1)), resident((1, h1)),       # layer-1 params
            resident((h1, h2)), resident((1, h2)),         # layer-2 params
            resident((h2, f_out)), resident((1, f_out)),   # output params
        ],
        out_specs=pl.BlockSpec((tb, f_out), lambda i: (i, 0)),
        compiler_params=pltpu.CompilerParams(
            dimension_semantics=("parallel",),   # megacore split on v7x
            vmem_limit_bytes=vmem_limit,
        ),
        cost_estimate=pl.CostEstimate(flops=flops, transcendentals=0,
                                      bytes_accessed=bytes_accessed),
    )(x, w1, b1, w2, b2, w3, b3)


def pack_rp_params(params):
    """One-time packing (call OUTSIDE the per-step path).

    params: tuple of 3 layers, each (w0 (in,out), b0 (1,out),
                                     pw (d, in*out), pb (d, out)).
    Concatenates all fixed projection matrices so the per-call composition is a
    single GEMV theta @ P_all instead of six small ones.
    """
    w0s = tuple(p[0] for p in params)
    b0s = tuple(p[1] for p in params)
    proj = jnp.concatenate(
        [jnp.concatenate([p[2], p[3]], axis=1) for p in params], axis=1)
    return (w0s, b0s, proj)


@functools.partial(jax.jit, static_argnames=("compute_dtype", "out_dtype"))
def fc_rp_forward(x, basis_weights, packed, compute_dtype=jnp.bfloat16,
                  out_dtype=None):
    """FC_RP forward: fused effective-weight composition + fused Pallas MLP.

    packed: result of pack_rp_params(params).
    """
    if out_dtype is None:
        out_dtype = x.dtype
    w0s, b0s, proj = packed
    theta = basis_weights[:, 0]                      # (d,)
    delta = theta @ proj                             # single GEMV, fp32

    # Un-concatenate (static offsets) and compose effective params in fp32,
    # then cast weights to the bf16 MXU operand dtype (biases stay fp32).
    eff_w, eff_b = [], []
    off = 0
    for w0, b0 in zip(w0s, b0s):
        nw = w0.shape[0] * w0.shape[1]
        nb = b0.shape[1]
        w_eff = w0 + delta[off:off + nw].reshape(w0.shape)
        off += nw
        b_eff = b0 + delta[off:off + nb].reshape(b0.shape)
        off += nb
        eff_w.append(w_eff.astype(compute_dtype))
        eff_b.append(b_eff.astype(jnp.float32))

    # Zero-pad hidden dims to multiples of 128 so layer-2/3 operands and the
    # hidden activations are lane-dense.  Exact: padded columns produce
    # relu(0 + 0) = 0 activations which multiply zero-padded weight rows.
    h1 = w0s[0].shape[1]
    h2 = w0s[1].shape[1]
    h1p = _round_up(h1, 128)
    h2p = _round_up(h2, 128)
    w1 = jnp.pad(eff_w[0], ((0, 0), (0, h1p - h1)))
    b1 = jnp.pad(eff_b[0], ((0, 0), (0, h1p - h1)))
    w2 = jnp.pad(eff_w[1], ((0, h1p - h1), (0, h2p - h2)))
    b2 = jnp.pad(eff_b[1], ((0, 0), (0, h2p - h2)))
    w3 = jnp.pad(eff_w[2], ((0, h2p - h2), (0, 0)))
    b3 = eff_b[2]

    return _fused_mlp(x.astype(compute_dtype), w1, b1, w2, b2, w3, b3,
                      out_dtype=out_dtype)


def init_linear_rp(key, fan_in, fan_out, d, dtype=jnp.float32):
    # Base params match nn.Linear's default U(-1/sqrt(fan_in), ...), stored as
    # (fan_in, fan_out); random projections are fixed (non-trainable).
    kw, kb, kpw, kpb = jax.random.split(key, 4)
    bound = 1.0 / (fan_in ** 0.5)
    w0 = jax.random.uniform(kw, (fan_in, fan_out), dtype, -bound, bound)
    b0 = jax.random.uniform(kb, (1, fan_out), dtype, -bound, bound)
    pw = jax.random.normal(kpw, (d, fan_in * fan_out), dtype) / ((fan_in * fan_out) ** 0.5)
    pb = jax.random.normal(kpb, (d, fan_out), dtype) / (fan_out ** 0.5)
    return (w0, b0, pw, pb)


def reference_fc_rp(x, basis_weights, params, compute_dtype=jnp.bfloat16):
    # Pure-JAX reference with the same bf16-operand / fp32-accumulate recipe.
    # (Note: casting W_eff to bf16 can hide the RP delta when theta ~ 0; the
    # kernel matches this reference because both compose in fp32 first.)
    theta = basis_weights[:, 0]
    h = x
    for (w0, b0, pw, pb) in params:
        w = (w0 + (theta @ pw).reshape(w0.shape)).astype(compute_dtype)
        b = (b0 + (theta @ pb).reshape(b0.shape)).astype(jnp.float32)
        h = jnp.dot(h.astype(compute_dtype), w, preferred_element_type=jnp.float32)
        h = jnp.maximum(h + b, 0.0)
    return h.astype(x.dtype)


if __name__ == "__main__":
    # Small shapes consistent with the module: batch=8, f_in=32, h1=64, h2=48,
    # f_out=16, intrinsic dimension d=8.
    B, F_IN, H1, H2, F_OUT, D = 8, 32, 64, 48, 16, 8

    key = jax.random.PRNGKey(0)
    kx, kt, k1, k2, k3 = jax.random.split(key, 5)

    x = jax.random.normal(kx, (B, F_IN), jnp.float32)
    # FC_RP initializes basis_weights to zeros; use small random values here so
    # the random-projection path is actually exercised numerically.
    basis_weights = 0.1 * jax.random.normal(kt, (D, 1), jnp.float32)
    params = (
        init_linear_rp(k1, F_IN, H1, D),
        init_linear_rp(k2, H1, H2, D),
        init_linear_rp(k3, H2, F_OUT, D),
    )
    packed = pack_rp_params(params)   # one-time, outside the per-call path

    out = fc_rp_forward(x, basis_weights, packed)
    out = jax.block_until_ready(out)

    ref = reference_fc_rp(x, basis_weights, params)
    assert out.shape == (B, F_OUT)
    assert out.dtype == x.dtype
    assert jnp.allclose(out, ref, atol=1e-2, rtol=1e-2), float(jnp.max(jnp.abs(out - ref)))

    print("KERNEL_OK")
</pallas_src>

<mosaic_0001>
module attributes {stable_mosaic.version = 11 : i64} {
  func.func @fc_kernel(%arg0: i32, %arg1: memref<8x32xbf16, #tpu.memory_space<vmem>>, %arg2: memref<32x128xbf16, #tpu.memory_space<vmem>>, %arg3: memref<1x128xf32, #tpu.memory_space<vmem>>, %arg4: memref<128x128xbf16, #tpu.memory_space<vmem>>, %arg5: memref<1x128xf32, #tpu.memory_space<vmem>>, %arg6: memref<128x16xbf16, #tpu.memory_space<vmem>>, %arg7: memref<1x16xf32, #tpu.memory_space<vmem>>, %arg8: memref<8x16xf32, #tpu.memory_space<vmem>>) attributes {dimension_semantics = [#tpu.dimension_semantics<parallel>], iteration_bounds = array<i64: 1>, scalar_prefetch = 0 : i64, scratch_operands = 0 : i64, tpu.core_type = #tpu.core_type<tc>, window_params = [{transform_indices = @transform_0, window_bounds = array<i64: 8, 32>}, {pipeline_mode = #tpu.pipeline_mode<synchronous>, transform_indices = @transform_1, window_bounds = array<i64: 32, 128>}, {pipeline_mode = #tpu.pipeline_mode<synchronous>, transform_indices = @transform_2, window_bounds = array<i64: 1, 128>}, {pipeline_mode = #tpu.pipeline_mode<synchronous>, transform_indices = @transform_3, window_bounds = array<i64: 128, 128>}, {pipeline_mode = #tpu.pipeline_mode<synchronous>, transform_indices = @transform_4, window_bounds = array<i64: 1, 128>}, {pipeline_mode = #tpu.pipeline_mode<synchronous>, transform_indices = @transform_5, window_bounds = array<i64: 128, 16>}, {pipeline_mode = #tpu.pipeline_mode<synchronous>, transform_indices = @transform_6, window_bounds = array<i64: 1, 16>}, {transform_indices = @transform_7, window_bounds = array<i64: 8, 16>}]} {
    %c0 = arith.constant 0 : index
    %c0_0 = arith.constant 0 : index
    %0 = vector.load %arg1[%c0, %c0_0] : memref<8x32xbf16, #tpu.memory_space<vmem>>, vector<8x32xbf16>
    %c0_1 = arith.constant 0 : index
    %c0_2 = arith.constant 0 : index
    %1 = vector.load %arg2[%c0_1, %c0_2] : memref<32x128xbf16, #tpu.memory_space<vmem>>, vector<32x128xbf16>
    %cst = arith.constant dense<0.000000e+00> : vector<8x128xf32>
    %2 = tpu.matmul %0, %1, %cst {dimension_numbers = #tpu.dot_dimension_numbers<[1], [0], [0], [1], [0, 0, 1, 1], [], []>} : vector<8x32xbf16>, vector<32x128xbf16>, vector<8x128xf32> -> vector<8x128xf32>
    %c0_3 = arith.constant 0 : index
    %c0_4 = arith.constant 0 : index
    %3 = vector.load %arg3[%c0_3, %c0_4] : memref<1x128xf32, #tpu.memory_space<vmem>>, vector<1x128xf32>
    %4 = vector.broadcast %3 : vector<1x128xf32> to vector<8x128xf32>
    %5 = arith.addf %2, %4 : vector<8x128xf32>
    %cst_5 = arith.constant 0.000000e+00 : f32
    %6 = vector.broadcast %cst_5 : f32 to vector<8x128xf32>
    %7 = arith.maximumf %5, %6 : vector<8x128xf32>
    %8 = arith.truncf %7 : vector<8x128xf32> to vector<8x128xbf16>
    %c0_6 = arith.constant 0 : index
    %c0_7 = arith.constant 0 : index
    %9 = vector.load %arg4[%c0_6, %c0_7] : memref<128x128xbf16, #tpu.memory_space<vmem>>, vector<128x128xbf16>
    %cst_8 = arith.constant dense<0.000000e+00> : vector<8x128xf32>
    %10 = tpu.matmul %8, %9, %cst_8 {dimension_numbers = #tpu.dot_dimension_numbers<[1], [0], [0], [1], [0, 0, 1, 1], [], []>} : vector<8x128xbf16>, vector<128x128xbf16>, vector<8x128xf32> -> vector<8x128xf32>
    %c0_9 = arith.constant 0 : index
    %c0_10 = arith.constant 0 : index
    %11 = vector.load %arg5[%c0_9, %c0_10] : memref<1x128xf32, #tpu.memory_space<vmem>>, vector<1x128xf32>
    %12 = vector.broadcast %11 : vector<1x128xf32> to vector<8x128xf32>
    %13 = arith.addf %10, %12 : vector<8x128xf32>
    %cst_11 = arith.constant 0.000000e+00 : f32
    %14 = vector.broadcast %cst_11 : f32 to vector<8x128xf32>
    %15 = arith.maximumf %13, %14 : vector<8x128xf32>
    %16 = arith.truncf %15 : vector<8x128xf32> to vector<8x128xbf16>
    %c0_12 = arith.constant 0 : index
    %c0_13 = arith.constant 0 : index
    %17 = vector.load %arg6[%c0_12, %c0_13] : memref<128x16xbf16, #tpu.memory_space<vmem>>, vector<128x16xbf16>
    %cst_14 = arith.constant dense<0.000000e+00> : vector<8x16xf32>
    %18 = tpu.matmul %16, %17, %cst_14 {dimension_numbers = #tpu.dot_dimension_numbers<[1], [0], [0], [1], [0, 0, 1, 1], [], []>} : vector<8x128xbf16>, vector<128x16xbf16>, vector<8x16xf32> -> vector<8x16xf32>
    %c0_15 = arith.constant 0 : index
    %c0_16 = arith.constant 0 : index
    %19 = vector.load %arg7[%c0_15, %c0_16] : memref<1x16xf32, #tpu.memory_space<vmem>>, vector<1x16xf32>
    %20 = vector.broadcast %19 : vector<1x16xf32> to vector<8x16xf32>
    %21 = arith.addf %18, %20 : vector<8x16xf32>
    %cst_17 = arith.constant 0.000000e+00 : f32
    %22 = vector.broadcast %cst_17 : f32 to vector<8x16xf32>
    %23 = arith.maximumf %21, %22 : vector<8x16xf32>
    %c0_18 = arith.constant 0 : index
    %c0_19 = arith.constant 0 : index
    %24 = vector.load %arg8[%c0_18, %c0_19] : memref<8x16xf32, #tpu.memory_space<vmem>>, vector<8x16xf32>
    tpu.vector_store %arg8[%c0_18, %c0_19], %23 {strides = array<i32>} : memref<8x16xf32, #tpu.memory_space<vmem>>, vector<8x16xf32>,
    return
  }
  func.func @transform_0(%arg0: i32) -> (i32, i32) {
    %c0_i32 = arith.constant 0 : i32
    %c0_i32_0 = arith.constant 0 : i32
    return %arg0, %c0_i32 : i32, i32
  }
  func.func @transform_1(%arg0: i32) -> (i32, i32) {
    %c0_i32 = arith.constant 0 : i32
    %c0_i32_0 = arith.constant 0 : i32
    %c0_i32_1 = arith.constant 0 : i32
    return %c0_i32, %c0_i32_0 : i32, i32
  }
  func.func @transform_2(%arg0: i32) -> (i32, i32) {
    %c0_i32 = arith.constant 0 : i32
    %c0_i32_0 = arith.constant 0 : i32
    %c0_i32_1 = arith.constant 0 : i32
    return %c0_i32, %c0_i32_0 : i32, i32
  }
  func.func @transform_3(%arg0: i32) -> (i32, i32) {
    %c0_i32 = arith.constant 0 : i32
    %c0_i32_0 = arith.constant 0 : i32
    %c0_i32_1 = arith.constant 0 : i32
    return %c0_i32, %c0_i32_0 : i32, i32
  }
  func.func @transform_4(%arg0: i32) -> (i32, i32) {
    %c0_i32 = arith.constant 0 : i32
    %c0_i32_0 = arith.constant 0 : i32
    %c0_i32_1 = arith.constant 0 : i32
    return %c0_i32, %c0_i32_0 : i32, i32
  }
  func.func @transform_5(%arg0: i32) -> (i32, i32) {
    %c0_i32 = arith.constant 0 : i32
    %c0_i32_0 = arith.constant 0 : i32
    %c0_i32_1 = arith.constant 0 : i32
    return %c0_i32, %c0_i32_0 : i32, i32
  }
  func.func @transform_6(%arg0: i32) -> (i32, i32) {
    %c0_i32 = arith.constant 0 : i32
    %c0_i32_0 = arith.constant 0 : i32
    %c0_i32_1 = arith.constant 0 : i32
    return %c0_i32, %c0_i32_0 : i32, i32
  }
  func.func @transform_7(%arg0: i32) -> (i32, i32) {
    %c0_i32 = arith.constant 0 : i32
    %c0_i32_0 = arith.constant 0 : i32
    return %arg0, %c0_i32 : i32, i32
  }
}

</mosaic_0001>

<llo_original>
// kernel: fc_rp_forward.1
$region0: #{fc_rp_forward.1}
  #allocation0 [shape = 'u32[]', space=smem, size = 0x4, offset = 0x4, fixed_abs, tag = 'smem constant byte address 0x4 - core index']
  #allocation1 [shape = 'u32[144,128]{1,0:T(1,128)}', space=vmem, size = 0x12000, scoped, tag = 'internal scratch']
  %s0 = inlined_call_operand.vmem [shape: bf16[8,32], index: 0, kind: input, shape index: {}]
  %s1 = inlined_call_operand.vmem [shape: bf16[32,128], index: 1, kind: input, shape index: {}]
  %s2 = inlined_call_operand.vmem [shape: f32[1,128], index: 2, kind: input, shape index: {}]
  %s3 = inlined_call_operand.vmem [shape: bf16[128,128], index: 3, kind: input, shape index: {}]
  %s4 = inlined_call_operand.vmem [shape: f32[1,128], index: 4, kind: input, shape index: {}]
  %s5 = inlined_call_operand.vmem [shape: bf16[128,16], index: 5, kind: input, shape index: {}]
  %s6 = inlined_call_operand.vmem [shape: f32[1,16], index: 6, kind: input, shape index: {}]
  %s7 = inlined_call_operand.hbm [shape: f32[8,16], index: 7, kind: output, shape index: {}]
  %s8 = sld [smem:[#allocation0]]
  $region38: #{fc_rp_forward.1} parent=0
    _
  %s10 = ssub.s32 1, %s8
  %s11 = scalar_select 0, %s10, %s8
  $region1: #{fc_rp_forward.1} parent=0
    #allocation2 [shape = 'u8[4096]{0}', space=vmem, size = 0x1000, scoped, tag = 'output window, operand 0, single buffered']
    #allocation3 [shape = 's32[1]{0}', space=sflag, size = 0x4, scoped, tag = 'scoped memory for fc_rp_forward.1']
    %12 = vsyncpa [#allocation3], 0
    // Predicated region
    $region2: #{fc_rp_forward.1} parent=1 // pred_check
      _
    $region3: #{fc_rp_forward.1} parent=1 // pred_check_branch
      %14 = sbr.rel (0) target = $region5
    $region4: #{fc_rp_forward.1} parent=1 // pred_region
      _
    $region5: #{fc_rp_forward.1} parent=1 // pred_fallthru
      _
    // Predicated region
    $region6: #{fc_rp_forward.1} parent=1 // pred_check
      _
    $region7: #{fc_rp_forward.1} parent=1 // pred_check_branch
      %16 = sbr.rel (0) target = $region9
    $region8: #{fc_rp_forward.1} parent=1 // pred_region
      _
    $region9: #{fc_rp_forward.1} parent=1 // pred_fallthru
      _
    // Predicated region
    $region10: #{fc_rp_forward.1} parent=1 // pred_check
      _
    $region11: #{fc_rp_forward.1} parent=1 // pred_check_branch
      %18 = sbr.rel (0) target = $region13
    $region12: #{fc_rp_forward.1} parent=1 // pred_region
      _
    $region13: #{fc_rp_forward.1} parent=1 // pred_fallthru
      _
    // Predicated region
    $region14: #{fc_rp_forward.1} parent=1 // pred_check
      _
    $region15: #{fc_rp_forward.1} parent=1 // pred_check_branch
      %20 = sbr.rel (0) target = $region17
    $region16: #{fc_rp_forward.1} parent=1 // pred_region
      _
    $region17: #{fc_rp_forward.1} parent=1 // pred_fallthru
      _
    // Predicated region
    $region18: #{fc_rp_forward.1} parent=1 // pred_check
      _
    $region19: #{fc_rp_forward.1} parent=1 // pred_check_branch
      %22 = sbr.rel (0) target = $region21
    $region20: #{fc_rp_forward.1} parent=1 // pred_region
      _
    $region21: #{fc_rp_forward.1} parent=1 // pred_fallthru
      _
    // Predicated region
    $region22: #{fc_rp_forward.1} parent=1 // pred_check
      _
    $region23: #{fc_rp_forward.1} parent=1 // pred_check_branch
      %24 = sbr.rel (0) target = $region25
    $region24: #{fc_rp_forward.1} parent=1 // pred_region
      _
    $region25: #{fc_rp_forward.1} parent=1 // pred_fallthru
      _
    // Predicated region
    $region26: #{fc_rp_forward.1} parent=1 // pred_check
      _
    $region27: #{fc_rp_forward.1} parent=1 // pred_check_branch
      %26 = sbr.rel (0) target = $region29
    $region28: #{fc_rp_forward.1} parent=1 // pred_region
      _
    $region29: #{fc_rp_forward.1} parent=1 // pred_fallthru
      _
    %v28 = vld [vmem:[%s0] sm:$0xf]
    %v29 = vld [vmem:[%s1] sm:$0xf]
    %v30 = vld [vmem:[%s1 + $0x4] sm:$0xf]
    %v31 = vld [vmem:[%s1 + $0x8] sm:$0xf]
    %v32 = vld [vmem:[%s1 + $0xc] sm:$0xf]
    %v33 = vld [vmem:[%s2] sm:$0x1]
    %v35 = vlaneseq
    %v36 = vshrl.u32 %v35, 7
    %v37 = vsub.s32 0, %v36
    %v38 = vrot.slane %v33, %v37
    %v44 = vunpack.c.l.b16 %v29
    %v45 = vunpack.c.l.b16 %v30
    %v46 = vunpack.c.l.b16 %v31
    %v47 = vunpack.c.l.b16 %v32
    %v48 = vpack.c.b16 %v45, %v44
    %v49 = vpack.c.b16 %v47, %v46
    %vm52 = vcmask 261120
    %v54 = vsel %vm52, %v28, 0
    %56 = vmatprep.subr.bf16.mxu0 0
    %57 = vmatpush1.bf16.msra.mxu0 %v48
    %58 = vmatprep.subr.bf16.mxu0 0
    %59 = vmatpush1.bf16.msra.mxu0 %v49
    %60 = vmatprep.subr.bf16.mxu0 0
    %61 = vmatpush1.bf16.msra.mxu0 0
    %62 = vmatprep.subr.bf16.mxu0 0
    %63 = vmatpush1.bf16.msra.mxu0 0
    %64 = vmatprep.subr.bf16.mxu0 0
    %65 = vmatpush1.bf16.msra.mxu0 0
    %66 = vmatprep.subr.bf16.mxu0 0
    %67 = vmatpush1.bf16.msra.mxu0 0
    %68 = vmatprep.subr.bf16.mxu0 0
    %69 = vmatpush1.bf16.msra.mxu0 0
    %70 = vmatprep.subr.bf16.mxu0 0
    %71 = vmatpush1.bf16.msra.mxu0 0
    %72 = vmatprep.subr.bf16.mxu0 0
    %73 = vmatpush1.bf16.msra.mxu0 0
    %74 = vmatprep.subr.bf16.mxu0 0
    %75 = vmatpush1.bf16.msra.mxu0 0
    %76 = vmatprep.subr.bf16.mxu0 0
    %77 = vmatpush1.bf16.msra.mxu0 0
    %78 = vmatprep.subr.bf16.mxu0 0
    %79 = vmatpush1.bf16.msra.mxu0 0
    %80 = vmatprep.subr.bf16.mxu0 0
    %81 = vmatpush1.bf16.msra.mxu0 0
    %82 = vmatprep.subr.bf16.mxu0 0
    %83 = vmatpush1.bf16.msra.mxu0 0
    %84 = vmatprep.subr.bf16.mxu0 0
    %85 = vmatpush1.bf16.msra.mxu0 0
    %86 = vmatprep.subr.bf16.mxu0 0
    %87 = vmatpush1.bf16.msra.mxu0 0
    %88 = vmatprep.mubr.bf16.mxu0 0
    %89 = vmatmul.mubr.bf16.gmra.mrb[0].mxu0 %v54
    %v90 = vpop.f32.mrb[0].mxu0
    %v91 = vadd.f32 %v38, %v90
    %v92 = vpop.f32.mrb[0].mxu0
    %v93 = vpop.f32.mrb[0].mxu0
    %v94 = vpop.f32.mrb[0].mxu0
    %95 = vdwg.mxu0
    %v96 = vmax.f32 %v91, 0.0
    %v97 = vpack.c.bf16 %v96, %v96
    %v98 = vld [vmem:[%s3] sm:$0xf]
    %v99 = vld [vmem:[%s3 + $0x4] sm:$0xf]
    %v100 = vld [vmem:[%s3 + $0x8] sm:$0xf]
    %v101 = vld [vmem:[%s3 + $0xc] sm:$0xf]
    %v102 = vld [vmem:[%s3 + $0x10] sm:$0xf]
    %v103 = vld [vmem:[%s3 + $0x14] sm:$0xf]
    %v104 = vld [vmem:[%s3 + $0x18] sm:$0xf]
    %v105 = vld [vmem:[%s3 + $0x1c] sm:$0xf]
    %v106 = vld [vmem:[%s3 + $0x20] sm:$0xf]
    %v107 = vld [vmem:[%s3 + $0x24] sm:$0xf]
    %v108 = vld [vmem:[%s3 + $0x28] sm:$0xf]
    %v109 = vld [vmem:[%s3 + $0x2c] sm:$0xf]
    %v110 = vld [vmem:[%s3 + $0x30] sm:$0xf]
    %v111 = vld [vmem:[%s3 + $0x34] sm:$0xf]
    %v112 = vld [vmem:[%s3 + $0x38] sm:$0xf]
    %v113 = vld [vmem:[%s3 + $0x3c] sm:$0xf]
    %v114 = vld [vmem:[%s4] sm:$0x1]
    %v116 = vlaneseq
    %v117 = vshrl.u32 %v116, 7
    %v118 = vsub.s32 0, %v117
    %v119 = vrot.slane %v114, %v118
    %v137 = vunpack.c.l.b16 %v98
    %v138 = vunpack.c.l.b16 %v99
    %v139 = vunpack.c.l.b16 %v100
    %v140 = vunpack.c.l.b16 %v101
    %v141 = vunpack.c.l.b16 %v102
    %v142 = vunpack.c.l.b16 %v103
    %v143 = vunpack.c.l.b16 %v104
    %v144 = vunpack.c.l.b16 %v105
    %v145 = vunpack.c.l.b16 %v106
    %v146 = vunpack.c.l.b16 %v107
    %v147 = vunpack.c.l.b16 %v108
    %v148 = vunpack.c.l.b16 %v109
    %v149 = vunpack.c.l.b16 %v110
    %v150 = vunpack.c.l.b16 %v111
    %v151 = vunpack.c.l.b16 %v112
    %v152 = vunpack.c.l.b16 %v113
    %v153 = vpack.c.b16 %v138, %v137
    %v154 = vpack.c.b16 %v140, %v139
    %v155 = vpack.c.b16 %v142, %v141
    %v156 = vpack.c.b16 %v144, %v143
    %v157 = vpack.c.b16 %v146, %v145
    %v158 = vpack.c.b16 %v148, %v147
    %v159 = vpack.c.b16 %v150, %v149
    %v160 = vpack.c.b16 %v152, %v151
    %169 = vmatprep.subr.bf16.mxu0 0
    %170 = vmatpush1.bf16.msra.mxu0 %v153
    %171 = vmatprep.subr.bf16.mxu0 0
    %172 = vmatpush1.bf16.msra.mxu0 %v154
    %173 = vmatprep.subr.bf16.mxu0 0
    %174 = vmatpush1.bf16.msra.mxu0 %v155
    %175 = vmatprep.subr.bf16.mxu0 0
    %176 = vmatpush1.bf16.msra.mxu0 %v156
    %177 = vmatprep.subr.bf16.mxu0 0
    %178 = vmatpush1.bf16.msra.mxu0 %v157
    %179 = vmatprep.subr.bf16.mxu0 0
    %180 = vmatpush1.bf16.msra.mxu0 %v158
    %181 = vmatprep.subr.bf16.mxu0 0
    %182 = vmatpush1.bf16.msra.mxu0 %v159
    %183 = vmatprep.subr.bf16.mxu0 0
    %184 = vmatpush1.bf16.msra.mxu0 %v160
    %185 = vmatprep.subr.bf16.mxu0 0
    %186 = vmatpush1.bf16.msra.mxu0 0
    %187 = vmatprep.subr.bf16.mxu0 0
    %188 = vmatpush1.bf16.msra.mxu0 0
    %189 = vmatprep.subr.bf16.mxu0 0
    %190 = vmatpush1.bf16.msra.mxu0 0
    %191 = vmatprep.subr.bf16.mxu0 0
    %192 = vmatpush1.bf16.msra.mxu0 0
    %193 = vmatprep.subr.bf16.mxu0 0
    %194 = vmatpush1.bf16.msra.mxu0 0
    %195 = vmatprep.subr.bf16.mxu0 0
    %196 = vmatpush1.bf16.msra.mxu0 0
    %197 = vmatprep.subr.bf16.mxu0 0
    %198 = vmatpush1.bf16.msra.mxu0 0
    %199 = vmatprep.subr.bf16.mxu0 0
    %200 = vmatpush1.bf16.msra.mxu0 0
    %201 = vmatprep.mubr.bf16.mxu0 0
    %202 = vmatmul.mubr.bf16.gmra.mrb[0].mxu0 %v97
    %v203 = vpop.f32.mrb[0].mxu0
    %v204 = vadd.f32 %v119, %v203
    %v205 = vpop.f32.mrb[0].mxu0
    %v206 = vpop.f32.mrb[0].mxu0
    %v207 = vpop.f32.mrb[0].mxu0
    %208 = vdwg.mxu0
    %v209 = vmax.f32 %v204, 0.0
    %v210 = vpack.c.bf16 %v209, %v209
    %v211 = vld [vmem:[%s5] sm:$0xf]
    %v212 = vld [vmem:[%s5 + $0x4] sm:$0xf]
    %v213 = vld [vmem:[%s5 + $0x8] sm:$0xf]
    %v214 = vld [vmem:[%s5 + $0xc] sm:$0xf]
    %v215 = vld [vmem:[%s5 + $0x10] sm:$0xf]
    %v216 = vld [vmem:[%s5 + $0x14] sm:$0xf]
    %v217 = vld [vmem:[%s5 + $0x18] sm:$0xf]
    %v218 = vld [vmem:[%s5 + $0x1c] sm:$0xf]
    %v219 = vld [vmem:[%s5 + $0x20] sm:$0xf]
    %v220 = vld [vmem:[%s5 + $0x24] sm:$0xf]
    %v221 = vld [vmem:[%s5 + $0x28] sm:$0xf]
    %v222 = vld [vmem:[%s5 + $0x2c] sm:$0xf]
    %v223 = vld [vmem:[%s5 + $0x30] sm:$0xf]
    %v224 = vld [vmem:[%s5 + $0x34] sm:$0xf]
    %v225 = vld [vmem:[%s5 + $0x38] sm:$0xf]
    %v226 = vld [vmem:[%s5 + $0x3c] sm:$0xf]
    %v227 = vld [vmem:[%s6] sm:$0x1]
    %v229 = vlaneseq
    %v230 = vshrl.u32 %v229, 7
    %v231 = vsub.s32 0, %v230
    %v232 = vrot.slane %v227, %v231
    %v250 = vunpack.c.l.b16 %v211
    %v251 = vunpack.c.l.b16 %v212
    %v252 = vunpack.c.l.b16 %v213
    %v253 = vunpack.c.l.b16 %v214
    %v254 = vunpack.c.l.b16 %v215
    %v255 = vunpack.c.l.b16 %v216
    %v256 = vunpack.c.l.b16 %v217
    %v257 = vunpack.c.l.b16 %v218
    %v258 = vunpack.c.l.b16 %v219
    %v259 = vunpack.c.l.b16 %v220
    %v260 = vunpack.c.l.b16 %v221
    %v261 = vunpack.c.l.b16 %v222
    %v262 = vunpack.c.l.b16 %v223
    %v263 = vunpack.c.l.b16 %v224
    %v264 = vunpack.c.l.b16 %v225
    %v265 = vunpack.c.l.b16 %v226
    %v266 = vpack.c.b16 %v251, %v250
    %v267 = vpack.c.b16 %v253, %v252
    %v268 = vpack.c.b16 %v255, %v254
    %v269 = vpack.c.b16 %v257, %v256
    %v270 = vpack.c.b16 %v259, %v258
    %v271 = vpack.c.b16 %v261, %v260
    %v272 = vpack.c.b16 %v263, %v262
    %v273 = vpack.c.b16 %v265, %v264
    %282 = vmatprep.subr.bf16.mxu0 0
    %283 = vmatpush1.bf16.msra.mxu0 %v266
    %284 = vmatprep.subr.bf16.mxu0 0
    %285 = vmatpush1.bf16.msra.mxu0 %v267
    %286 = vmatprep.subr.bf16.mxu0 0
    %287 = vmatpush1.bf16.msra.mxu0 %v268
    %288 = vmatprep.subr.bf16.mxu0 0
    %289 = vmatpush1.bf16.msra.mxu0 %v269
    %290 = vmatprep.subr.bf16.mxu0 0
    %291 = vmatpush1.bf16.msra.mxu0 %v270
    %292 = vmatprep.subr.bf16.mxu0 0
    %293 = vmatpush1.bf16.msra.mxu0 %v271
    %294 = vmatprep.subr.bf16.mxu0 0
    %295 = vmatpush1.bf16.msra.mxu0 %v272
    %296 = vmatprep.subr.bf16.mxu0 0
    %297 = vmatpush1.bf16.msra.mxu0 %v273
    %298 = vmatprep.subr.bf16.mxu0 0
    %299 = vmatpush1.bf16.msra.mxu0 0
    %300 = vmatprep.subr.bf16.mxu0 0
    %301 = vmatpush1.bf16.msra.mxu0 0
    %302 = vmatprep.subr.bf16.mxu0 0
    %303 = vmatpush1.bf16.msra.mxu0 0
    %304 = vmatprep.subr.bf16.mxu0 0
    %305 = vmatpush1.bf16.msra.mxu0 0
    %306 = vmatprep.subr.bf16.mxu0 0
    %307 = vmatpush1.bf16.msra.mxu0 0
    %308 = vmatprep.subr.bf16.mxu0 0
    %309 = vmatpush1.bf16.msra.mxu0 0
    %310 = vmatprep.subr.bf16.mxu0 0
    %311 = vmatpush1.bf16.msra.mxu0 0
    %312 = vmatprep.subr.bf16.mxu0 0
    %313 = vmatpush1.bf16.msra.mxu0 0
    %314 = vmatprep.mubr.bf16.mxu0 0
    %315 = vmatmul.mubr.bf16.gmra.mrb[0].mxu0 %v210
    %v316 = vpop.f32.mrb[0].mxu0
    %v317 = vadd.f32 %v232, %v316
    %v318 = vpop.f32.mrb[0].mxu0
    %v319 = vpop.f32.mrb[0].mxu0
    %v320 = vpop.f32.mrb[0].mxu0
    %321 = vdwg.mxu0
    %v322 = vmax.f32 %v317, 0.0
    %vm323 = vcmask 130048
    %324 = vst.msk [vmem:[#allocation2] sm:$0xff] %vm323, %v322
    // Predicated region
    $region30: #{fc_rp_forward.1} parent=1 // pred_check
      _
    $region31: #{fc_rp_forward.1} parent=1 // pred_check_branch
      %326 = sbr.rel (0) target = $region33
    $region32: #{fc_rp_forward.1} parent=1 // pred_region
      %s328 = ssub.s32 128, 128
      %329 = vsyncadd [#allocation3], %s328
      %s331 = sshll.u32 [#allocation2], 4
      %s332 = int_to_ptr.vmem [resolvable:$true] %s331
      %334 = dma.vmem_to_hbm [thread:$0]  %s332, 128, %s7, [#allocation3]
    $region33: #{fc_rp_forward.1} parent=1 // pred_fallthru
      _
    // Predicated region
    $region34: #{fc_rp_forward.1} parent=1 // pred_check
      _
    $region35: #{fc_rp_forward.1} parent=1 // pred_check_branch
      %336 = sbr.rel (0) target = $region37
    $region36: #{fc_rp_forward.1} parent=1 // pred_region
      %337 = dma.done [#allocation3], 128
    $region37: #{fc_rp_forward.1} parent=1 // pred_fallthru
      _
    %338 = vsyncpa [#allocation3], 1

</llo_original>
